<compile_context>
chip_gen: v7x
topology: tpu7x:2x2x1
jax: 0.10.0
libtpu: 0.0.40
codegen_flags: <defaults>
</compile_context>

<pallas_src>
import functools
import math

import jax
import jax.numpy as jnp
from jax.experimental import pallas as pl
from jax.experimental.pallas import tpu as pltpu


def identity_copy_kernel(x_ref, o_ref):
    """Copy one (rows, W) tile unchanged."""
    o_ref[...] = x_ref[...]


# Candidate lane-dense widths (largest first); all multiples of the 128-lane axis.
_LANE_WIDTHS = (2048, 1024, 512, 256, 128)


def _sublane_multiple(dtype) -> int:
    """Minimum legal sublane tile for the dtype (f32:8, bf16:16, int8/fp8:32)."""
    itemsize = jnp.dtype(dtype).itemsize
    return {4: 8, 2: 16, 1: 32}.get(itemsize, 8)


def identity_map_config():
    # Mirrors IdentityMap.config (Python-side metadata; nothing to lower).
    return {"mm_projector_type": "identity"}


@functools.partial(jax.jit, static_argnames=("tile_bytes", "donate_input"))
def identity_map_forward(x, *, tile_bytes=1 << 20, donate_input=False):
    """IdentityMap.forward: returns x unchanged (materialized via a Pallas copy).

    tile_bytes:    ~bytes per VMEM buffer (pipeline uses ~4x this, double-buffered
                   input + output). 1 MiB is within every generation's default.
    donate_input:  set True only when the caller no longer needs x; aliases the
                   output onto the input buffer (removes the second HBM allocation).
    """
    orig_shape = x.shape
    total = math.prod(orig_shape) if orig_shape else 1
    if total == 0:
        return x  # nothing to copy

    # ---- Pick a lane-dense 2-D view (identity does not care about features). ----
    w = None
    for cand in _LANE_WIDTHS:
        if total % cand == 0:
            w = cand
            break
    if w is not None:
        x2 = x.reshape(total // w, w)           # lane-dense: unmasked vst
    elif x.ndim >= 2:
        x2 = x.reshape(-1, orig_shape[-1])      # fallback: full-extent last dim
    else:
        x2 = x.reshape(1, total)                # scalars / odd 1-D inputs

    M, D = x2.shape
    itemsize = jnp.dtype(x.dtype).itemsize
    sub = _sublane_multiple(x.dtype)

    # ---- Byte-based row-tile sizing, rounded to the dtype sublane multiple. ----
    rows = max(sub, (tile_bytes // max(1, D * itemsize)) // sub * sub)
    if rows >= M:
        block_rows = M                           # full extent: legal for any dtype
        grid = (1,)
    else:
        block_rows = rows
        grid = (pl.cdiv(M, block_rows),)         # partial tail block is masked

    out = pl.pallas_call(
        identity_copy_kernel,
        out_shape=jax.ShapeDtypeStruct((M, D), x.dtype),
        grid=grid,
        in_specs=[pl.BlockSpec((block_rows, D), lambda i: (i, 0))],
        out_specs=pl.BlockSpec((block_rows, D), lambda i: (i, 0)),
        input_output_aliases=({0: 0} if donate_input else {}),
        compiler_params=pltpu.CompilerParams(
            dimension_semantics=("parallel",),
            vmem_limit_bytes=32 * 1024 * 1024,
        ),
    )(x2)

    return out.reshape(orig_shape)


if __name__ == "__main__":
    key = jax.random.PRNGKey(0)
    k1, k2, k3 = jax.random.split(key, 3)

    # Typical multimodal-projector activation: (batch=2, seq=8, hidden=64).
    # total=1024 elements -> lane-dense (1, 1024) view, single grid step.
    x = jax.random.normal(k1, (2, 8, 64), jnp.float32)
    out = jax.block_until_ready(identity_map_forward(x))
    assert out.shape == x.shape and out.dtype == x.dtype, (out.shape, out.dtype)
    assert jnp.array_equal(out, x), "identity mismatch"

    # Ragged token count, last dim < 128, element count not lane-divisible:
    # exercises the full-extent fallback path (no pad, no post-slice).
    y = jax.random.normal(k2, (3, 7, 64), jnp.float32)
    out_y = jax.block_until_ready(identity_map_forward(y))
    assert out_y.shape == y.shape and out_y.dtype == y.dtype
    assert jnp.array_equal(out_y, y), "identity mismatch (ragged)"

    # bf16 input with a small tile budget to force a multi-step grid with a
    # masked tail block (36 rows of 2048 lanes, block_rows=16 -> grid=3).
    z = jax.random.normal(k3, (2, 72, 512), jnp.float32).astype(jnp.bfloat16)
    out_z = jax.block_until_ready(
        identity_map_forward(z, tile_bytes=64 * 1024, donate_input=True))
    assert out_z.shape == z.shape and out_z.dtype == z.dtype
    assert jnp.array_equal(out_z, z), "identity mismatch (bf16, tail block)"

    assert identity_map_config() == {"mm_projector_type": "identity"}
    print("KERNEL_OK")
</pallas_src>

<mosaic_0001>
module attributes {stable_mosaic.version = 11 : i64} {
  func.func @identity_copy_kernel(%arg0: i32, %arg1: memref<1x1024xf32, #tpu.memory_space<vmem>>, %arg2: memref<1x1024xf32, #tpu.memory_space<vmem>>) attributes {dimension_semantics = [#tpu.dimension_semantics<parallel>], iteration_bounds = array<i64: 1>, scalar_prefetch = 0 : i64, scratch_operands = 0 : i64, tpu.core_type = #tpu.core_type<tc>, window_params = [{transform_indices = @transform_0, window_bounds = array<i64: 1, 1024>}, {transform_indices = @transform_1, window_bounds = array<i64: 1, 1024>}]} {
    %c0 = arith.constant 0 : index
    %c0_0 = arith.constant 0 : index
    %0 = vector.load %arg1[%c0, %c0_0] : memref<1x1024xf32, #tpu.memory_space<vmem>>, vector<1x1024xf32>
    %c0_1 = arith.constant 0 : index
    %c0_2 = arith.constant 0 : index
    %1 = vector.load %arg2[%c0_1, %c0_2] : memref<1x1024xf32, #tpu.memory_space<vmem>>, vector<1x1024xf32>
    tpu.vector_store %arg2[%c0_1, %c0_2], %0 {strides = array<i32>} : memref<1x1024xf32, #tpu.memory_space<vmem>>, vector<1x1024xf32>,
    return
  }
  func.func @transform_0(%arg0: i32) -> (i32, i32) {
    %c0_i32 = arith.constant 0 : i32
    %c0_i32_0 = arith.constant 0 : i32
    return %arg0, %c0_i32 : i32, i32
  }
  func.func @transform_1(%arg0: i32) -> (i32, i32) {
    %c0_i32 = arith.constant 0 : i32
    %c0_i32_0 = arith.constant 0 : i32
    return %arg0, %c0_i32 : i32, i32
  }
}

</mosaic_0001>

<llo_original>
// kernel: identity_map_forward.1
$region0: #{identity_map_forward.1}
  #allocation0 [shape = 'u32[]', space=smem, size = 0x4, offset = 0x4, fixed_abs, tag = 'smem constant byte address 0x4 - core index']
  #allocation1 [shape = 'u32[144,128]{1,0:T(1,128)}', space=vmem, size = 0x12000, scoped, tag = 'internal scratch']
  %s0 = inlined_call_operand.vmem [shape: f32[1,1024], index: 0, kind: input, shape index: {}]
  %s1 = inlined_call_operand.vmem [shape: f32[1,1024], index: 1, kind: output, shape index: {}]
  %s2 = sld [smem:[#allocation0]]
  $region14: #{identity_map_forward.1} parent=0
    _
  %s4 = ssub.s32 1, %s2
  %s5 = scalar_select 0, %s4, %s2
  // Predicated region
  $region2: #{identity_map_forward.1} parent=0 // pred_check
    _
  $region3: #{identity_map_forward.1} parent=0 // pred_check_branch
    %7 = sbr.rel (0) target = $region5
  $region4: #{identity_map_forward.1} parent=0 // pred_region
    _
  $region5: #{identity_map_forward.1} parent=0 // pred_fallthru
    _
  %v8 = vld [vmem:[%s0] sm:$0xff]
  %9 = vst [vmem:[%s1] sm:$0xff] %v8
  // Predicated region
  $region6: #{identity_map_forward.1} parent=0 // pred_check
    _
  $region7: #{identity_map_forward.1} parent=0 // pred_check_branch
    %11 = sbr.rel (0) target = $region9
  $region8: #{identity_map_forward.1} parent=0 // pred_region
    _
  $region9: #{identity_map_forward.1} parent=0 // pred_fallthru
    _
  // Predicated region
  $region10: #{identity_map_forward.1} parent=0 // pred_check
    _
  $region11: #{identity_map_forward.1} parent=0 // pred_check_branch
    %13 = sbr.rel (0) target = $region13
  $region12: #{identity_map_forward.1} parent=0 // pred_region
    _
  $region13: #{identity_map_forward.1} parent=0 // pred_fallthru
    _

</llo_original>
